<compile_context>
chip_gen: v7x
topology: tpu7x:2x2x1
jax: 0.10.0
libtpu: 0.0.40
codegen_flags: <defaults>
</compile_context>

<pallas_src>
import math

import jax
import jax.numpy as jnp
from jax.experimental import pallas as pl
from jax.experimental.pallas import tpu as pltpu


# -----------------------------------------------------------------------------
# Path 1: identity via buffer aliasing (zero-copy when the input is donated).
# -----------------------------------------------------------------------------
def _noop_kernel(x_hbm_ref, o_hbm_ref):
    # Output HBM buffer is aliased onto the input; it already holds x, so no
    # DMA and no compute are needed.
    pass  # intentional no-op


def decoder_layer_forward(x: jax.Array) -> jax.Array:
    """Pallas equivalent of DeCoderLayer.forward (identity).

    NOTE: the truly optimal identity is simply `return x` (no custom call at
    all).  This pallas_call exists so the layer has a Pallas op; with the
    input donated (see __main__), the alias makes it a true zero-copy no-op.
    """
    return pl.pallas_call(
        _noop_kernel,
        out_shape=jax.ShapeDtypeStruct(x.shape, x.dtype),
        # Leave both operands in place (HBM); no auto-pipelined DMA is issued.
        in_specs=[pl.BlockSpec(memory_space=pl.ANY)],
        out_specs=pl.BlockSpec(memory_space=pl.ANY),
        # Alias input 0 -> output 0: the "result" is simply the input buffer.
        input_output_aliases={0: 0},
    )(x)


# -----------------------------------------------------------------------------
# Path 2: materialized copy as a chunked HBM -> HBM DMA (no VMEM staging).
# -----------------------------------------------------------------------------
_MAX_DMA_CHUNKS = 4  # a few DMAs in flight is enough to saturate HBM


def _make_dma_copy_kernel(chunk_bounds):
    """Build a kernel issuing one async HBM->HBM DMA per (lo, hi) chunk."""

    def kernel(x_hbm_ref, o_hbm_ref, sem):
        copies = []
        for i, (lo, hi) in enumerate(chunk_bounds):
            if lo is None:  # whole-array copy
                cp = pltpu.make_async_copy(x_hbm_ref, o_hbm_ref, sem.at[i])
            else:  # static slice of the leading axis -> zero-cost ref view
                cp = pltpu.make_async_copy(
                    x_hbm_ref.at[lo:hi], o_hbm_ref.at[lo:hi], sem.at[i]
                )
            cp.start()
            copies.append(cp)
        for cp in copies:
            cp.wait()

    return kernel


def decoder_layer_forward_copy(x: jax.Array) -> jax.Array:
    """Identity as an explicit copy, done with direct HBM->HBM DMAs."""
    if x.ndim == 0 or x.shape[0] <= 1:
        chunk_bounds = [(None, None)]
    else:
        leading = x.shape[0]
        n_chunks = min(_MAX_DMA_CHUNKS, leading)
        base, rem = divmod(leading, n_chunks)
        chunk_bounds = []
        lo = 0
        for i in range(n_chunks):
            hi = lo + base + (1 if i < rem else 0)
            chunk_bounds.append((lo, hi))
            lo = hi

    kernel = _make_dma_copy_kernel(chunk_bounds)
    return pl.pallas_call(
        kernel,
        out_shape=jax.ShapeDtypeStruct(x.shape, x.dtype),
        in_specs=[pl.BlockSpec(memory_space=pl.ANY)],
        out_specs=pl.BlockSpec(memory_space=pl.ANY),
        scratch_shapes=[pltpu.SemaphoreType.DMA((len(chunk_bounds),))],
    )(x)


# -----------------------------------------------------------------------------
# Path 3: lane-dense tiled VMEM copy (only for aligned element counts).
# -----------------------------------------------------------------------------
_LANES = 128
# 4096 rows x 128 lanes x 4 B = 2 MiB per f32 block.  Double buffering
# (2 in + 2 out) -> ~8 MiB pipeline footprint: under v5e's 16 MiB scoped
# default, v6e's 32 MiB, and v7x's 32 MiB scoped / 64 MiB physical per TC,
# while amortizing the ~0.35 us per-grid-step overhead to <10%.
_TARGET_ROW_TILE = 4096


def _copy_kernel(x_ref, o_ref):
    o_ref[...] = x_ref[...]


def decoder_layer_forward_copy_tiled(x: jax.Array) -> jax.Array:
    """Identity as a BlockSpec-pipelined VMEM copy (lane/sublane aligned only)."""
    n = math.prod(x.shape)
    itemsize = jnp.dtype(x.dtype).itemsize
    # Sublane alignment per dtype packing: 8 rows (32-bit), 16 (16-bit), 32 (8-bit).
    sublane = 8 * max(1, 4 // itemsize)
    rows = n // _LANES
    if n % _LANES != 0 or rows % sublane != 0:
        # No wrapper-side pad/slice (each would be a full extra HBM read+write);
        # ragged sizes go through the HBM->HBM DMA path instead.
        return decoder_layer_forward_copy(x)

    row_tile = min(_TARGET_ROW_TILE, rows)  # _TARGET_ROW_TILE % sublane == 0
    x2d = x.reshape(rows, _LANES)  # contiguous reshape: lane-dense view, free

    grid = (pl.cdiv(rows, row_tile),)
    y2d = pl.pallas_call(
        _copy_kernel,
        out_shape=jax.ShapeDtypeStruct((rows, _LANES), x.dtype),
        grid=grid,
        in_specs=[pl.BlockSpec((row_tile, _LANES), lambda i: (i, 0))],
        out_specs=pl.BlockSpec((row_tile, _LANES), lambda i: (i, 0)),
        compiler_params=pltpu.CompilerParams(
            dimension_semantics=("parallel",)  # shards grid across TCs on v7x
        ),
    )(x2d)
    return y2d.reshape(x.shape)


if __name__ == "__main__":
    # DeCoderLayer defaults to hidden_dim=12 but forward is shape-agnostic;
    # use small TPU-friendly shapes: batch=2, seq=8, hidden=32.
    key = jax.random.PRNGKey(0)
    shape = (2, 8, 32)
    x = jax.random.normal(key, shape, dtype=jnp.float32)
    # Same values in a *separate* buffer, so we can still compare after x is
    # donated to the aliased no-op path below.
    x_expected = jax.random.normal(key, shape, dtype=jnp.float32)

    # 1) Zero-copy identity: donate x so input_output_aliases is a true no-op.
    fwd_donated = jax.jit(decoder_layer_forward, donate_argnums=0)
    y = jax.block_until_ready(fwd_donated(x))
    assert y.shape == shape and y.dtype == jnp.float32
    assert bool(jnp.array_equal(y, x_expected))

    # 2) HBM->HBM DMA copy, lane-aligned element count.
    x1 = jax.random.normal(jax.random.PRNGKey(1), (2, 8, 32), dtype=jnp.float32)
    y1 = jax.block_until_ready(decoder_layer_forward_copy(x1))
    assert y1.shape == x1.shape and y1.dtype == x1.dtype
    assert bool(jnp.array_equal(y1, x1))

    # 2b) HBM->HBM DMA copy, ragged element count (n % 128 != 0).
    x2 = jax.random.normal(jax.random.PRNGKey(2), (3, 8, 40), dtype=jnp.float32)
    y2 = jax.block_until_ready(decoder_layer_forward_copy(x2))
    assert y2.shape == x2.shape and y2.dtype == x2.dtype
    assert bool(jnp.array_equal(y2, x2))

    # 3) Tiled lane-dense VMEM copy (aligned element count, no pad/slice).
    x3 = jax.random.normal(jax.random.PRNGKey(3), (2, 8, 256), dtype=jnp.float32)
    y3 = jax.block_until_ready(decoder_layer_forward_copy_tiled(x3))
    assert y3.shape == x3.shape and y3.dtype == x3.dtype
    assert bool(jnp.array_equal(y3, x3))

    print("KERNEL_OK")
</pallas_src>

<mosaic_0001>
module attributes {stable_mosaic.version = 11 : i64} {
  func.func @_noop_kernel(%arg0: memref<2x8x32xf32, #tpu.memory_space<any>>, %arg1: memref<2x8x32xf32, #tpu.memory_space<any>>) attributes {dimension_semantics = [], scalar_prefetch = 0 : i64, scratch_operands = 0 : i64, tpu.core_type = #tpu.core_type<tc>} {
    return
  }
}

</mosaic_0001>

<llo_original>
// kernel: decoder_layer_forward.1
$region0: #{decoder_layer_forward.1}
  #allocation0 [shape = 'u32[]', space=smem, size = 0x4, offset = 0x4, fixed_abs, tag = 'smem constant byte address 0x4 - core index']
  #allocation1 [shape = 'u32[144,128]{1,0:T(1,128)}', space=vmem, size = 0x12000, scoped, tag = 'internal scratch']
  %s0 = inlined_call_operand.hbm [shape: f32[2,8,32], index: 0, kind: input, shape index: {}, may-alias: {0,1}]
  %s1 = inlined_call_operand.hbm [shape: f32[2,8,32], index: 1, kind: output, shape index: {}, may-alias: {0,1}]
  %s2 = sld [smem:[#allocation0]]
  $region2: #{decoder_layer_forward.1} parent=0
    _
  %s4 = ssub.s32 1, %s2
  %s5 = scalar_select 0, %s4, %s2

</llo_original>
